<compile_context>
chip_gen: v5e
topology: v5e:2x2
jax: 0.10.0
libtpu: 0.0.40
codegen_flags: <defaults>
</compile_context>

<pallas_src>
import functools

import jax
import jax.numpy as jnp
from jax.experimental import pallas as pl
from jax.experimental.pallas import tpu as pltpu


def _conv_bn_act_kernel(x_ref, w_ref, shift_ref, o_ref, *, act, b_blk):
    # x_ref:     (b_blk, C_in, t_hw)   spatial tile(s) of a batch block (NCHW layout)
    # w_ref:     (C_out, C_in)         BN-folded 1x1 conv weight
    # shift_ref: (C_out, 1)            BN-folded bias / shift
    # o_ref:     (b_blk, C_out, t_hw)  lane-dense output tile(s)
    w = w_ref[...]
    shift = shift_ref[...]
    for b in range(b_blk):  # static unroll over the batch block
        acc = jnp.dot(w, x_ref[b], preferred_element_type=jnp.float32)
        acc = acc + shift
        if act == "relu":
            acc = jnp.maximum(acc, 0.0)
        elif act == "tanh":
            acc = jnp.tanh(acc)
        elif act == "sigmoid":
            acc = 0.5 * jnp.tanh(0.5 * acc) + 0.5  # one EUP op instead of exp+div
        else:
            raise ValueError(f"unsupported act: {act}")
        o_ref[b] = acc.astype(o_ref.dtype)


def _vmem_capacity_bytes():
    # Per-generation VMEM: 128 MiB on v5e/v6e, 64 MiB per TensorCore on v7x.
    try:
        cap = getattr(pltpu.get_tpu_info(), "vmem_capacity_bytes", None)
        if cap:
            return int(cap)
    except Exception:
        pass
    return 64 * 1024 * 1024  # conservative default (v7x)


def _choose_tiles(N, C_in, C_out, HW, itemsize, budget):
    """Pick the batch block b_blk and spatial tile t_hw.

    Goals: (a) each grid step moves >= ~1 MiB of HBM data so the ~0.35us
    per-step overhead is amortized, (b) double-buffered x/out tiles + the f32
    accumulator + (possibly double-buffered) constants fit the per-generation
    VMEM budget, (c) the (batch, spatial) grid has >= 2 steps whenever possible
    so both v7x TensorCores get work.
    """
    const_bytes = 2 * (C_out * C_in * itemsize + C_out * 4)  # weight + shift

    def step_bytes(b_blk, t_hw):
        x_b = b_blk * C_in * t_hw * itemsize
        o_b = b_blk * C_out * t_hw * itemsize
        acc = b_blk * C_out * t_hw * 4  # f32 matmul accumulator / act intermediate
        return 2 * (x_b + o_b + acc) + const_bytes

    # --- spatial tile: as large as the VMEM budget allows (full HW if it fits)
    if HW <= 128 or step_bytes(1, HW) <= budget:
        t_hw = HW
    else:
        per_lane = 2 * ((C_in + C_out) * itemsize + C_out * 4)
        t_max = max((budget - const_bytes) // per_lane, 128)
        t_hw = max((min(t_max, HW) // 128) * 128, 128)
    n_hw = pl.cdiv(HW, t_hw)

    # --- avoid a 1x1 grid: split a single big image spatially for the 2nd TC
    if N == 1 and n_hw == 1 and HW >= 256:
        t_hw = ((pl.cdiv(HW, 2) + 127) // 128) * 128
        n_hw = pl.cdiv(HW, t_hw)

    # --- batch block: fuse several small images per step, keep >= 2 grid steps
    b_blk = 1
    if n_hw == 1 and N > 1:
        moved = (C_in + C_out) * HW * itemsize               # HBM bytes/step at b_blk=1
        want = max(1, -(-(1 << 20) // moved))                # target ~1 MiB per step
        per_b = 2 * ((C_in + C_out) * itemsize + 4 * C_out) * HW
        fit = max(1, int((budget - const_bytes) // per_b))
        b_blk = int(min(want, fit, max(1, N // 2)))          # leave >= 2 batch blocks
        while b_blk > 1 and N % b_blk != 0:                  # evenly sized blocks
            b_blk -= 1
    return b_blk, t_hw, n_hw, step_bytes(b_blk, t_hw)


def conv_forward(x, params, *, norm=True, act="relu", eps=1e-5):
    """x: (N, C_in, H, W) NCHW -> (N, C_out, H, W). 1x1 conv, stride 1, pad 0."""
    w, b, gamma, beta, running_mean, running_var = params
    N, C_in, H, W = x.shape
    C_out = w.shape[0]
    assert w.shape == (C_out, C_in), (w.shape, (C_out, C_in))
    if act not in ("relu", "tanh", "sigmoid"):
        raise ValueError(f"unsupported act: {act}")

    # Fold BN (eval mode) + conv bias into the weight and a single shift.
    if norm:
        scale = gamma / jnp.sqrt(running_var + eps)                       # (C_out,)
        w_f = (w.astype(jnp.float32) * scale[:, None]).astype(x.dtype)
        shift = (scale * (b - running_mean) + beta).astype(jnp.float32)
    else:
        w_f = w.astype(x.dtype)
        shift = b.astype(jnp.float32)
    shift2 = shift.reshape(C_out, 1)

    HW = H * W
    x3 = x.reshape(N, C_in, HW)          # free reshape, NCHW stays contiguous
    itemsize = x.dtype.itemsize

    cap = _vmem_capacity_bytes()
    budget = max(cap - 8 * 1024 * 1024, 16 * 1024 * 1024)   # headroom for Mosaic scratch
    b_blk, t_hw, n_hw, step_need = _choose_tiles(N, C_in, C_out, HW, itemsize, budget)
    n_b = pl.cdiv(N, b_blk)
    vmem_limit = int(min(max(step_need + (1 << 20), 16 * 1024 * 1024), budget))

    cost = pl.CostEstimate(
        flops=2 * N * C_out * C_in * HW,
        transcendentals=(N * C_out * HW) if act in ("tanh", "sigmoid") else 0,
        bytes_accessed=(N * (C_in + C_out) * HW + C_out * C_in) * itemsize + C_out * 4,
    )

    kernel = functools.partial(_conv_bn_act_kernel, act=act, b_blk=b_blk)

    def build(single_buffer_consts):
        const_kw = dict(pipeline_mode=pl.Buffered(1)) if single_buffer_consts else {}
        return pl.pallas_call(
            kernel,
            out_shape=jax.ShapeDtypeStruct((N, C_out, HW), x.dtype),
            grid_spec=pltpu.PrefetchScalarGridSpec(
                num_scalar_prefetch=0,
                grid=(n_b, n_hw),
                in_specs=[
                    pl.BlockSpec((b_blk, C_in, t_hw), lambda n, j: (n, 0, j)),
                    pl.BlockSpec((C_out, C_in), lambda n, j: (0, 0), **const_kw),
                    pl.BlockSpec((C_out, 1), lambda n, j: (0, 0), **const_kw),
                ],
                out_specs=pl.BlockSpec((b_blk, C_out, t_hw), lambda n, j: (n, 0, j)),
            ),
            compiler_params=pltpu.CompilerParams(
                dimension_semantics=("parallel", "parallel"),
                vmem_limit_bytes=vmem_limit),
            cost_estimate=cost,
        )

    try:
        out3 = jax.block_until_ready(
            build(hasattr(pl, "Buffered"))(x3, w_f, shift2))
    except Exception:
        # Fallback if single-buffered constants (pl.Buffered(1)) are not supported
        # by this Pallas version; constants then just double-buffer (already
        # accounted for in the VMEM estimate).
        out3 = build(False)(x3, w_f, shift2)

    return out3.reshape(N, C_out, H, W)


def _reference(x, params, norm, act, eps=1e-5):
    w, b, gamma, beta, mean, var = params
    y = jnp.einsum("nchw,oc->nohw", x, w) + b[None, :, None, None]
    if norm:
        y = (y - mean[None, :, None, None]) / jnp.sqrt(var[None, :, None, None] + eps)
        y = y * gamma[None, :, None, None] + beta[None, :, None, None]
    if act == "relu":
        return jnp.maximum(y, 0.0)
    if act == "tanh":
        return jnp.tanh(y)
    return jax.nn.sigmoid(y)


if __name__ == "__main__":
    key = jax.random.PRNGKey(0)
    kx, kw, kb, kg, kbe, km, kv, kx2 = jax.random.split(key, 8)

    # Small shapes consistent with the module's forward: NCHW input.
    N, C_in, C_out, H, W = 2, 4, 8, 16, 16
    x = jax.random.normal(kx, (N, C_in, H, W), dtype=jnp.float32)

    std = 1.0 / jnp.sqrt(jnp.float32(C_in))
    w = jax.random.normal(kw, (C_out, C_in), dtype=jnp.float32) * std
    b = 0.1 * jax.random.normal(kb, (C_out,), dtype=jnp.float32)
    gamma = 1.0 + 0.1 * jax.random.normal(kg, (C_out,), dtype=jnp.float32)
    beta = 0.1 * jax.random.normal(kbe, (C_out,), dtype=jnp.float32)
    running_mean = 0.1 * jax.random.normal(km, (C_out,), dtype=jnp.float32)
    running_var = 1.0 + 0.1 * jnp.abs(jax.random.normal(kv, (C_out,), dtype=jnp.float32))
    params = (w, b, gamma, beta, running_mean, running_var)

    for norm, act in [(True, "relu"), (True, "sigmoid"), (False, "tanh")]:
        out = conv_forward(x, params, norm=norm, act=act)
        out = jax.block_until_ready(out)
        ref = _reference(x, params, norm, act)
        assert out.shape == (N, C_out, H, W), out.shape
        err = float(jnp.max(jnp.abs(out - ref)))
        assert err < 1e-4, (norm, act, err)

    # Many-small-image case: exercises the batch-blocked (b_blk > 1) path.
    N2, H2, W2 = 8, 8, 8
    x2 = jax.random.normal(kx2, (N2, C_in, H2, W2), dtype=jnp.float32)
    out2 = jax.block_until_ready(conv_forward(x2, params, norm=True, act="relu"))
    ref2 = _reference(x2, params, True, "relu")
    assert out2.shape == (N2, C_out, H2, W2), out2.shape
    err2 = float(jnp.max(jnp.abs(out2 - ref2)))
    assert err2 < 1e-4, err2

    print("KERNEL_OK")
</pallas_src>

<mosaic_0001>
module attributes {stable_mosaic.version = 11 : i64} {
  func.func @_conv_bn_act_kernel(%arg0: i32, %arg1: i32, %arg2: memref<1x4x256xf32, #tpu.memory_space<vmem>>, %arg3: memref<8x4xf32, #tpu.memory_space<vmem>>, %arg4: memref<8x1xf32, #tpu.memory_space<vmem>>, %arg5: memref<1x8x256xf32, #tpu.memory_space<vmem>>) attributes {dimension_semantics = [#tpu.dimension_semantics<parallel>, #tpu.dimension_semantics<parallel>], iteration_bounds = array<i64: 2, 1>, scalar_prefetch = 0 : i64, scratch_operands = 0 : i64, tpu.core_type = #tpu.core_type<tc>, window_params = [{transform_indices = @transform_0, window_bounds = array<i64: 1, 4, 256>}, {pipeline_mode = #tpu.pipeline_mode<synchronous>, transform_indices = @transform_1, window_bounds = array<i64: 8, 4>}, {pipeline_mode = #tpu.pipeline_mode<synchronous>, transform_indices = @transform_2, window_bounds = array<i64: 8, 1>}, {transform_indices = @transform_3, window_bounds = array<i64: 1, 8, 256>}]} {
    %c0 = arith.constant 0 : index
    %c0_0 = arith.constant 0 : index
    %0 = vector.load %arg3[%c0, %c0_0] : memref<8x4xf32, #tpu.memory_space<vmem>>, vector<8x4xf32>
    %c0_1 = arith.constant 0 : index
    %c0_2 = arith.constant 0 : index
    %1 = vector.load %arg4[%c0_1, %c0_2] : memref<8x1xf32, #tpu.memory_space<vmem>>, vector<8x1xf32>
    %c0_3 = arith.constant 0 : index
    %c0_4 = arith.constant 0 : index
    %c0_5 = arith.constant 0 : index
    %2 = vector.load %arg2[%c0_3, %c0_4, %c0_5] : memref<1x4x256xf32, #tpu.memory_space<vmem>>, vector<1x4x256xf32>
    %3 = vector.shape_cast %2 : vector<1x4x256xf32> to vector<4x256xf32>
    %cst = arith.constant dense<0.000000e+00> : vector<8x256xf32>
    %4 = tpu.matmul %0, %3, %cst {dimension_numbers = #tpu.dot_dimension_numbers<[1], [0], [0], [1], [0, 0, 1, 1], [], []>} : vector<8x4xf32>, vector<4x256xf32>, vector<8x256xf32> -> vector<8x256xf32>
    %5 = vector.broadcast %1 : vector<8x1xf32> to vector<8x256xf32>
    %6 = arith.addf %4, %5 : vector<8x256xf32>
    %cst_6 = arith.constant 0.000000e+00 : f32
    %7 = vector.broadcast %cst_6 : f32 to vector<8x256xf32>
    %8 = arith.maximumf %6, %7 : vector<8x256xf32>
    %c0_7 = arith.constant 0 : index
    %c0_8 = arith.constant 0 : index
    %c0_9 = arith.constant 0 : index
    %9 = vector.load %arg5[%c0_7, %c0_8, %c0_9] : memref<1x8x256xf32, #tpu.memory_space<vmem>>, vector<1x8x256xf32>
    %10 = vector.shape_cast %9 : vector<1x8x256xf32> to vector<8x256xf32>
    %11 = vector.shape_cast %8 : vector<8x256xf32> to vector<1x8x256xf32>
    tpu.vector_store %arg5[%c0_7, %c0_8, %c0_9], %11 {strides = array<i32>} : memref<1x8x256xf32, #tpu.memory_space<vmem>>, vector<1x8x256xf32>,
    return
  }
  func.func @transform_0(%arg0: i32, %arg1: i32) -> (i32, i32, i32) {
    %c0_i32 = arith.constant 0 : i32
    %c0_i32_0 = arith.constant 0 : i32
    return %arg0, %c0_i32, %arg1 : i32, i32, i32
  }
  func.func @transform_1(%arg0: i32, %arg1: i32) -> (i32, i32) {
    %c0_i32 = arith.constant 0 : i32
    %c0_i32_0 = arith.constant 0 : i32
    %c0_i32_1 = arith.constant 0 : i32
    return %c0_i32, %c0_i32_0 : i32, i32
  }
  func.func @transform_2(%arg0: i32, %arg1: i32) -> (i32, i32) {
    %c0_i32 = arith.constant 0 : i32
    %c0_i32_0 = arith.constant 0 : i32
    %c0_i32_1 = arith.constant 0 : i32
    return %c0_i32, %c0_i32_0 : i32, i32
  }
  func.func @transform_3(%arg0: i32, %arg1: i32) -> (i32, i32, i32) {
    %c0_i32 = arith.constant 0 : i32
    %c0_i32_0 = arith.constant 0 : i32
    return %arg0, %c0_i32, %arg1 : i32, i32, i32
  }
}

module attributes {stable_mosaic.version = 11 : i64} {
  func.func @_conv_bn_act_kernel(%arg0: i32, %arg1: i32, %arg2: memref<1x4x256xf32, #tpu.memory_space<vmem>>, %arg3: memref<8x4xf32, #tpu.memory_space<vmem>>, %arg4: memref<8x1xf32, #tpu.memory_space<vmem>>, %arg5: memref<1x8x256xf32, #tpu.memory_space<vmem>>) attributes {dimension_semantics = [#tpu.dimension_semantics<parallel>, #tpu.dimension_semantics<parallel>], iteration_bounds = array<i64: 2, 1>, scalar_prefetch = 0 : i64, scratch_operands = 0 : i64, tpu.core_type = #tpu.core_type<tc>, window_params = [{transform_indices = @transform_0, window_bounds = array<i64: 1, 4, 256>}, {pipeline_mode = #tpu.pipeline_mode<synchronous>, transform_indices = @transform_1, window_bounds = array<i64: 8, 4>}, {pipeline_mode = #tpu.pipeline_mode<synchronous>, transform_indices = @transform_2, window_bounds = array<i64: 8, 1>}, {transform_indices = @transform_3, window_bounds = array<i64: 1, 8, 256>}]} {
    %c0 = arith.constant 0 : index
    %c0_0 = arith.constant 0 : index
    %0 = vector.load %arg3[%c0, %c0_0] : memref<8x4xf32, #tpu.memory_space<vmem>>, vector<8x4xf32>
    %c0_1 = arith.constant 0 : index
    %c0_2 = arith.constant 0 : index
    %1 = vector.load %arg4[%c0_1, %c0_2] : memref<8x1xf32, #tpu.memory_space<vmem>>, vector<8x1xf32>
    %c0_3 = arith.constant 0 : index
    %c0_4 = arith.constant 0 : index
    %c0_5 = arith.constant 0 : index
    %2 = vector.load %arg2[%c0_3, %c0_4, %c0_5] : memref<1x4x256xf32, #tpu.memory_space<vmem>>, vector<1x4x256xf32>
    %3 = vector.shape_cast %2 : vector<1x4x256xf32> to vector<4x256xf32>
    %cst = arith.constant dense<0.000000e+00> : vector<8x256xf32>
    %4 = tpu.matmul %0, %3, %cst {dimension_numbers = #tpu.dot_dimension_numbers<[1], [0], [0], [1], [0, 0, 1, 1], [], []>} : vector<8x4xf32>, vector<4x256xf32>, vector<8x256xf32> -> vector<8x256xf32>
    %5 = vector.broadcast %1 : vector<8x1xf32> to vector<8x256xf32>
    %6 = arith.addf %4, %5 : vector<8x256xf32>
    %cst_6 = arith.constant 0.000000e+00 : f32
    %7 = vector.broadcast %cst_6 : f32 to vector<8x256xf32>
    %8 = arith.maximumf %6, %7 : vector<8x256xf32>
    %c0_7 = arith.constant 0 : index
    %c0_8 = arith.constant 0 : index
    %c0_9 = arith.constant 0 : index
    %9 = vector.load %arg5[%c0_7, %c0_8, %c0_9] : memref<1x8x256xf32, #tpu.memory_space<vmem>>, vector<1x8x256xf32>
    %10 = vector.shape_cast %9 : vector<1x8x256xf32> to vector<8x256xf32>
    %11 = vector.shape_cast %8 : vector<8x256xf32> to vector<1x8x256xf32>
    tpu.vector_store %arg5[%c0_7, %c0_8, %c0_9], %11 {strides = array<i32>} : memref<1x8x256xf32, #tpu.memory_space<vmem>>, vector<1x8x256xf32>,
    return
  }
  func.func @transform_0(%arg0: i32, %arg1: i32) -> (i32, i32, i32) {
    %c0_i32 = arith.constant 0 : i32
    %c0_i32_0 = arith.constant 0 : i32
    return %arg0, %c0_i32, %arg1 : i32, i32, i32
  }
  func.func @transform_1(%arg0: i32, %arg1: i32) -> (i32, i32) {
    %c0_i32 = arith.constant 0 : i32
    %c0_i32_0 = arith.constant 0 : i32
    %c0_i32_1 = arith.constant 0 : i32
    return %c0_i32, %c0_i32_0 : i32, i32
  }
  func.func @transform_2(%arg0: i32, %arg1: i32) -> (i32, i32) {
    %c0_i32 = arith.constant 0 : i32
    %c0_i32_0 = arith.constant 0 : i32
    %c0_i32_1 = arith.constant 0 : i32
    return %c0_i32, %c0_i32_0 : i32, i32
  }
  func.func @transform_3(%arg0: i32, %arg1: i32) -> (i32, i32, i32) {
    %c0_i32 = arith.constant 0 : i32
    %c0_i32_0 = arith.constant 0 : i32
    return %arg0, %c0_i32, %arg1 : i32, i32, i32
  }
}

</mosaic_0001>

<llo_original>
// kernel: tpu_custom_call.1
$region0: #{tpu_custom_call.1}
  #allocation0 [shape = 'u32[]', space=smem, size = 0x4, offset = 0x4, fixed_abs, tag = 'smem constant byte address 0x4 - core index']
  #allocation1 [shape = 'u32[72,128]{1,0:T(1,128)}', space=vmem, size = 0x9000, scoped, tag = 'internal scratch']
  %s0 = inlined_call_operand.vmem [shape: f32[2,4,256], index: 0, kind: input, shape index: {}]
  %s1 = inlined_call_operand.vmem [shape: f32[8,4], index: 1, kind: input, shape index: {}]
  %s2 = inlined_call_operand.vmem [shape: f32[8,1], index: 2, kind: input, shape index: {}]
  %s3 = inlined_call_operand.hbm [shape: f32[2,8,256], index: 3, kind: output, shape index: {}]
  %s4 = sld [smem:[#allocation0]]
  $region45: #{tpu_custom_call.1} parent=0
    _
  %s6 = ssub.s32 1, %s4
  %s7 = scalar_select 0, %s6, %s4
  $region1: #{tpu_custom_call.1} parent=0
    #allocation2 [shape = 'u8[16384]{0}', space=vmem, size = 0x4000, scoped, tag = 'output window, operand 0']
    #allocation3 [shape = 's32[2]{0}', space=sflag, size = 0x8, scoped, tag = 'scoped memory for tpu_custom_call.1']
    %8 = vsyncpa [#allocation3], 0
    %s9 = scalar_lea.sflag [#allocation3], 1
    %10 = vsyncpa %s9, 0
    loop: start=0, step=1, limit=4
    $region2: #{tpu_custom_call.1} parent=1 // loop_pre_header
      _
    $region3: #{tpu_custom_call.1} parent=1 // loop_header
      %s12 = sphi 0, %s16
      %p13 = scmp.ge.s32.totalorder %s12, 4
      %s19 = sphi 0, %s31
      %s20 = sphi 0, %s27
      %s21 = sphi 0, %s19
      %s22 = sphi 0, %s20
      %s23 = sphi 0, %s21
      %s24 = sphi 0, %s22
      %s36 = sphi 0, %s38
      %s39 = sphi 0, %s36
      %s40 = sphi 0, %s39
      %s56 = sphi 0, %s40
      %s60 = sphi 0, %s60
      %s62 = sphi 0, %s60
      %s63 = sphi 0, %s62
      %s77 = sphi 0, %s63
      %s81 = sphi 0, %s81
      %s83 = sphi 0, %s81
      %s84 = sphi 0, %s83
      %s98 = sphi 0, %s84
      %s106 = sphi 0, %s108
      %s109 = sphi 0, %s106
      %s110 = sphi 0, %s109
      %s126 = sphi 0, %s110
    $region4: #{tpu_custom_call.1} parent=1 // loop_header_branch
      %15 = sbr.rel (%p13) target = $region8
    $region5: #{tpu_custom_call.1} parent=1 // loop_body
      %s17 = ssub.s32 %s12, 1
      %s18 = ssub.s32 %s12, 2
      %s25 = sadd.s32 1, %s20
      %p26 = scmp.ge.s32.totalorder %s25, 1
      %s27 = scalar_select %p26, 0, %s25
      %s28 = sadd.s32 1, %s19
      %s29 = scalar_select %p26, %s28, %s19
      %p30 = scmp.ge.s32.totalorder %s29, 2
      %s31 = scalar_select %p30, 0, %s29
      %s32 = ssub.s32 %s19, %s31
      %s33 = ssub.s32 %s20, %s27
      %s34 = sor.u32 %s32, %s33
      %p35 = scmp.eq.s32.totalorder %s34, 0
      %s37 = sadd.s32 %s36, 1
      %s38 = scalar_select %p35, %s36, %s37
      %p41 = pneg %p35
      %p42 = scmp.eq.s32.totalorder %s12, 1
      %p43 = por %p41, %p42
      %p44 = scmp.ne.s32.totalorder %s36, %s39
      %p45 = scmp.eq.s32.totalorder %s12, 0
      %p46 = por %p44, %p45
      %p47 = scmp.ne.s32.totalorder %s36, %s39
      %p48 = scmp.eq.s32.totalorder %s17, 1
      %p49 = por %p47, %p48
      %p50 = scmp.ne.s32.totalorder %s39, %s40
      %p51 = scmp.eq.s32.totalorder %s17, 0
      %p52 = por %p50, %p51
      %p53 = scmp.ne.s32.totalorder %s39, %s40
      %p54 = scmp.eq.s32.totalorder %s18, 1
      %p55 = por %p53, %p54
      %p57 = scmp.ne.s32.totalorder %s40, %s56
      %p58 = scmp.eq.s32.totalorder %s18, 0
      %p59 = por %p57, %p58
      %s61 = sadd.s32 %s60, 1
      %p64 = scmp.eq.s32.totalorder %s12, 1
      %p65 = scmp.ne.s32.totalorder %s60, %s62
      %p66 = scmp.eq.s32.totalorder %s12, 0
      %p67 = por %p65, %p66
      %p68 = scmp.ne.s32.totalorder %s60, %s62
      %p69 = scmp.eq.s32.totalorder %s17, 1
      %p70 = por %p68, %p69
      %p71 = scmp.ne.s32.totalorder %s62, %s63
      %p72 = scmp.eq.s32.totalorder %s17, 0
      %p73 = por %p71, %p72
      %p74 = scmp.ne.s32.totalorder %s62, %s63
      %p75 = scmp.eq.s32.totalorder %s18, 1
      %p76 = por %p74, %p75
      %p78 = scmp.ne.s32.totalorder %s63, %s77
      %p79 = scmp.eq.s32.totalorder %s18, 0
      %p80 = por %p78, %p79
      %s82 = sadd.s32 %s81, 1
      %p85 = scmp.eq.s32.totalorder %s12, 1
      %p86 = scmp.ne.s32.totalorder %s81, %s83
      %p87 = scmp.eq.s32.totalorder %s12, 0
      %p88 = por %p86, %p87
      %p89 = scmp.ne.s32.totalorder %s81, %s83
      %p90 = scmp.eq.s32.totalorder %s17, 1
      %p91 = por %p89, %p90
      %p92 = scmp.ne.s32.totalorder %s83, %s84
      %p93 = scmp.eq.s32.totalorder %s17, 0
      %p94 = por %p92, %p93
      %p95 = scmp.ne.s32.totalorder %s83, %s84
      %p96 = scmp.eq.s32.totalorder %s18, 1
      %p97 = por %p95, %p96
      %p99 = scmp.ne.s32.totalorder %s84, %s98
      %p100 = scmp.eq.s32.totalorder %s18, 0
      %p101 = por %p99, %p100
      %s102 = ssub.s32 %s19, %s31
      %s103 = ssub.s32 %s20, %s27
      %s104 = sor.u32 %s102, %s103
      %p105 = scmp.eq.s32.totalorder %s104, 0
      %s107 = sadd.s32 %s106, 1
      %s108 = scalar_select %p105, %s106, %s107
      %p111 = pneg %p105
      %p112 = scmp.eq.s32.totalorder %s12, 1
      %p113 = por %p111, %p112
      %p114 = scmp.ne.s32.totalorder %s106, %s109
      %p115 = scmp.eq.s32.totalorder %s12, 0
      %p116 = por %p114, %p115
      %p117 = scmp.ne.s32.totalorder %s106, %s109
      %p118 = scmp.eq.s32.totalorder %s17, 1
      %p119 = por %p117, %p118
      %p120 = scmp.ne.s32.totalorder %s109, %s110
      %p121 = scmp.eq.s32.totalorder %s17, 0
      %p122 = por %p120, %p121
      %p123 = scmp.ne.s32.totalorder %s109, %s110
      %p124 = scmp.eq.s32.totalorder %s18, 1
      %p125 = por %p123, %p124
      %p127 = scmp.ne.s32.totalorder %s110, %s126
      %p128 = scmp.eq.s32.totalorder %s18, 0
      %p129 = por %p127, %p128
      %p130 = scmp.le.s32.totalorder 1, %s12
      %p131 = scmp.lt.s32.totalorder %s12, 3
      %p132 = pnand %p130, %p131
      %p133 = pneg %p132
      // Predicated region
      $region9: #{tpu_custom_call.1} parent=5 // pred_check
        _
      $region10: #{tpu_custom_call.1} parent=5 // pred_check_branch
        %135 = sbr.rel (%p132) target = $region12
      $region11: #{tpu_custom_call.1} parent=5 // pred_region
        %s136 = ssub.s32 %s12, 1
        // Predicated region
        $region13: #{tpu_custom_call.1} parent=11 // pred_check
          %p137 = pneg %p73
        $region14: #{tpu_custom_call.1} parent=11 // pred_check_branch
          %139 = sbr.rel (%p137) target = $region16
        $region15: #{tpu_custom_call.1} parent=11 // pred_region
          _
        $region16: #{tpu_custom_call.1} parent=11 // pred_fallthru
          _
        // Predicated region
        $region17: #{tpu_custom_call.1} parent=11 // pred_check
          %p140 = pneg %p94
        $region18: #{tpu_custom_call.1} parent=11 // pred_check_branch
          %142 = sbr.rel (%p140) target = $region20
        $region19: #{tpu_custom_call.1} parent=11 // pred_region
          _
        $region20: #{tpu_custom_call.1} parent=11 // pred_fallthru
          _
      $region12: #{tpu_custom_call.1} parent=5 // pred_fallthru
        _
      %p143 = scmp.lt.s32.totalorder %s12, 2
      // Predicated region
      $region21: #{tpu_custom_call.1} parent=5 // pred_check
        %p144 = pneg %p143
      $region22: #{tpu_custom_call.1} parent=5 // pred_check_branch
        %146 = sbr.rel (%p144) target = $region24
      $region23: #{tpu_custom_call.1} parent=5 // pred_region
        // Predicated region
        $region25: #{tpu_custom_call.1} parent=23 // pred_check
          %p147 = pneg %p46
        $region26: #{tpu_custom_call.1} parent=23 // pred_check_branch
          %149 = sbr.rel (%p147) target = $region28
        $region27: #{tpu_custom_call.1} parent=23 // pred_region
          %s150 = smul.u32 2, %s20
          %p151 = scmp.lt.s32.totalorder %s19, 1
          %s152 = scalar_select %p151, %s19, 1
          %p153 = scmp.lt.s32.totalorder %s150, 1
          %s154 = scalar_select %p153, %s150, 1
          %s155 = smul.addr %s152, 2
          %s156 = sadd.s32 %s154, %s155
          %s157 = smul.addr %s156, 4
          %s158 = scalar_lea.vmem %s0, %s157
          %s159 = smul.u32 2, %s20
        $region28: #{tpu_custom_call.1} parent=23 // pred_fallthru
          _
      $region24: #{tpu_custom_call.1} parent=5 // pred_fallthru
        _
      %p160 = scmp.le.s32.totalorder 1, %s12
      %p161 = scmp.lt.s32.totalorder %s12, 3
      %p162 = pnand %p160, %p161
      %p163 = pneg %p162
      // Predicated region
      $region29: #{tpu_custom_call.1} parent=5 // pred_check
        _
      $region30: #{tpu_custom_call.1} parent=5 // pred_check_branch
        %165 = sbr.rel (%p162) target = $region32
      $region31: #{tpu_custom_call.1} parent=5 // pred_region
        %s166 = ssub.s32 %s12, 1
        %s167 = smul.u32 2, %s22
        %p168 = scmp.lt.s32.totalorder %s21, 1
        %s169 = scalar_select %p168, %s21, 1
        %p170 = scmp.lt.s32.totalorder %s167, 1
        %s171 = scalar_select %p170, %s167, 1
        %s172 = smul.addr %s169, 2
        %s173 = sadd.s32 %s171, %s172
        %s174 = smul.addr %s173, 4
        %s175 = scalar_lea.vmem %s0, %s174
        %p176 = pneg %p52
        %p177 = pneg %p49
        %p178 = pneg %p73
        %p179 = pneg %p70
        %p180 = pneg %p94
        %p181 = pneg %p91
        %p182 = pneg %p122
        %p183 = pneg %p119
        %s184 = sand.u32 %s109, 1
        %s185 = scalar_lea.sflag [#allocation3], %s184
        %s186 = sand.u32 %s109, 1
        %s187 = smul.addr %s186, 16
        %s188 = scalar_lea.vmem [#allocation2], %s187
        %s189 = smul.u32 2, %s22
        %p190 = scmp.lt.s32.totalorder %s21, 1
        %s191 = scalar_select %p190, %s21, 1
        %p192 = scmp.lt.s32.totalorder %s189, 1
        %s193 = scalar_select %p192, %s189, 1
        %s194 = smul.addr %s191, 2
        %s195 = sadd.s32 %s193, %s194
        %s196 = smul.addr %s195, 4
        %s197 = scalar_lea.vmem %s0, %s196
        %s198 = smul.u32 2, %s22
        %s199 = smul.u32 2, %s22
        %v200 = vld [vmem:[%s1] sm:$0xff]
        %v201 = vld [vmem:[%s2] sm:$0xff]
        %v202 = vld [vmem:[%s197] sm:$0xff]
        %204 = vset.pattern.permute.xlu0 0
        %205 = vperm.xlu0 %204, %v201
        %v206 = vpop.permute.xlu0 %205
        %209 = vst [vmem:[#allocation1] ss:$2 sm:$0xff] %v202
        %v210 = vld.sshfl [vmem:[#allocation1] sm:$0xff pattern:$0x75316420]
        %v211 = vld.sshfl [vmem:[#allocation1 + $0x8] sm:$0xff pattern:$0x75316420]
        %vm212 = vcmask 31744
        %v214 = vsel %vm212, %v200, 0
        %vm216 = vcmask 1043456
        %v217 = vsel %vm216, %v210, 0
        %v219 = vsel %vm216, %v211, 0
        %221 = vmatpush.msra.mxu0 0.0
        %222 = vmatpush.msra.mxu0 0.0
        %223 = vmatpush.msra.mxu0 0.0
        %224 = vmatpush.msra.mxu0 0.0
        %225 = vmatpush.msra.mxu0 0.0
        %226 = vmatpush.msra.mxu0 0.0
        %227 = vmatpush.msra.mxu0 0.0
        %228 = vmatpush.msra.mxu0 0.0
        %229 = vmatpush.msra.mxu0 0.0
        %230 = vmatpush.msra.mxu0 0.0
        %231 = vmatpush.msra.mxu0 0.0
        %232 = vmatpush.msra.mxu0 0.0
        %233 = vmatpush.msra.mxu0 0.0
        %234 = vmatpush.msra.mxu0 0.0
        %235 = vmatpush.msra.mxu0 0.0
        %236 = vmatpush.msra.mxu0 %v217
        %237 = vmatmul.f32.gmra.mxu0 %v214
        %v238 = vpop.f32.mrf.mxu0
        %v239 = vadd.f32 %v206, %v238
        %240 = vdwg.mxu0
        %241 = vmatpush.msra.mxu0 0.0
        %242 = vmatpush.msra.mxu0 0.0
        %243 = vmatpush.msra.mxu0 0.0
        %244 = vmatpush.msra.mxu0 0.0
        %245 = vmatpush.msra.mxu0 0.0
        %246 = vmatpush.msra.mxu0 0.0
        %247 = vmatpush.msra.mxu0 0.0
        %248 = vmatpush.msra.mxu0 0.0
        %249 = vmatpush.msra.mxu0 0.0
        %250 = vmatpush.msra.mxu0 0.0
        %251 = vmatpush.msra.mxu0 0.0
        %252 = vmatpush.msra.mxu0 0.0
        %253 = vmatpush.msra.mxu0 0.0
        %254 = vmatpush.msra.mxu0 0.0
        %255 = vmatpush.msra.mxu0 0.0
        %256 = vmatpush.msra.mxu0 %v219
        %257 = vmatmul.f32.gmra.mxu0 %v214
        %v258 = vpop.f32.mrf.mxu0
        %v259 = vadd.f32 %v206, %v258
        %260 = vdwg.mxu0
        %v261 = vmax.f32 %v239, 0.0
        %v262 = vmax.f32 %v259, 0.0
        %263 = vst [vmem:[%s188] sm:$0xff] %v261
        %264 = vst [vmem:[%s188 + $0x8] sm:$0xff] %v262
        %s265 = sand.u32 %s109, 1
        %s266 = scalar_lea.sflag [#allocation3], %s265
        %s267 = sand.u32 %s109, 1
        %s268 = smul.addr %s267, 16
        %s269 = scalar_lea.vmem [#allocation2], %s268
        // Predicated region
        $region33: #{tpu_custom_call.1} parent=31 // pred_check
          %p270 = pneg %p119
        $region34: #{tpu_custom_call.1} parent=31 // pred_check_branch
          %272 = sbr.rel (%p270) target = $region36
        $region35: #{tpu_custom_call.1} parent=31 // pred_region
          %s273 = smul.u32 2, %s22
          %275 = vsyncadd %s266, 0
          %s276 = smul.addr %s21, 2
          %s277 = sadd.s32 %s273, %s276
          %s278 = smul.addr %s277, 8
          %s279 = scalar_lea.hbm %s3, %s278
          %s281 = sshll.u32 %s269, 4
          %s282 = int_to_ptr.vmem [resolvable:$true] %s281
          %s283 = sshll.u32 %s279, 4
          %s284 = int_to_ptr.hbm [resolvable:$true] %s283
          %286 = dma.vmem_to_hbm [thread:$0]  %s282, 256, %s284, %s266
        $region36: #{tpu_custom_call.1} parent=31 // pred_fallthru
          _
      $region32: #{tpu_custom_call.1} parent=5 // pred_fallthru
        _
      %p287 = scmp.le.s32.totalorder 2, %s12
      // Predicated region
      $region37: #{tpu_custom_call.1} parent=5 // pred_check
        %p288 = pneg %p287
      $region38: #{tpu_custom_call.1} parent=5 // pred_check_branch
        %290 = sbr.rel (%p288) target = $region40
      $region39: #{tpu_custom_call.1} parent=5 // pred_region
        %s291 = ssub.s32 %s12, 2
        // Predicated region
        $region41: #{tpu_custom_call.1} parent=39 // pred_check
          %p292 = pneg %p125
        $region42: #{tpu_custom_call.1} parent=39 // pred_check_branch
          %294 = sbr.rel (%p292) target = $region44
        $region43: #{tpu_custom_call.1} parent=39 // pred_region
          %s295 = sand.u32 %s110, 1
          %s296 = scalar_lea.sflag [#allocation3], %s295
          %s297 = sand.u32 %s110, 1
          %s298 = smul.addr %s297, 16
          %s299 = scalar_lea.vmem [#allocation2], %s298
          %301 = dma.done %s296, 256
        $region44: #{tpu_custom_call.1} parent=39 // pred_fallthru
          _
      $region40: #{tpu_custom_call.1} parent=5 // pred_fallthru
        _
    $region6: #{tpu_custom_call.1} parent=1 // loop_footer
      %s16 = sadd.s32 1, %s12
    $region7: #{tpu_custom_call.1} parent=1 // loop_footer_branch
      %11 = sbr.rel target = $region3
    $region8: #{tpu_custom_call.1} parent=1 // loop_exit
      _
    %302 = vsyncpa [#allocation3], 1
    %s303 = scalar_lea.sflag [#allocation3], 1
    %304 = vsyncpa %s303, 1

// kernel: tpu_custom_call.1
$region0: #{tpu_custom_call.1}
  #allocation0 [shape = 'u32[]', space=smem, size = 0x4, offset = 0x4, fixed_abs, tag = 'smem constant byte address 0x4 - core index']
  #allocation1 [shape = 'u32[72,128]{1,0:T(1,128)}', space=vmem, size = 0x9000, scoped, tag = 'internal scratch']
  %s0 = inlined_call_operand.vmem [shape: f32[2,4,256], index: 0, kind: input, shape index: {}]
  %s1 = inlined_call_operand.vmem [shape: f32[8,4], index: 1, kind: input, shape index: {}]
  %s2 = inlined_call_operand.vmem [shape: f32[8,1], index: 2, kind: input, shape index: {}]
  %s3 = inlined_call_operand.hbm [shape: f32[2,8,256], index: 3, kind: output, shape index: {}]
  %s4 = sld [smem:[#allocation0]]
  $region45: #{tpu_custom_call.1} parent=0
    _
  %s6 = ssub.s32 1, %s4
  %s7 = scalar_select 0, %s6, %s4
  $region1: #{tpu_custom_call.1} parent=0
    #allocation2 [shape = 'u8[16384]{0}', space=vmem, size = 0x4000, scoped, tag = 'output window, operand 0']
    #allocation3 [shape = 's32[2]{0}', space=sflag, size = 0x8, scoped, tag = 'scoped memory for tpu_custom_call.1']
    %8 = vsyncpa [#allocation3], 0
    %s9 = scalar_lea.sflag [#allocation3], 1
    %10 = vsyncpa %s9, 0
    loop: start=0, step=1, limit=4
    $region2: #{tpu_custom_call.1} parent=1 // loop_pre_header
      _
    $region3: #{tpu_custom_call.1} parent=1 // loop_header
      %s12 = sphi 0, %s16
      %p13 = scmp.ge.s32.totalorder %s12, 4
      %s19 = sphi 0, %s31
      %s20 = sphi 0, %s27
      %s21 = sphi 0, %s19
      %s22 = sphi 0, %s20
      %s23 = sphi 0, %s21
      %s24 = sphi 0, %s22
      %s36 = sphi 0, %s38
      %s39 = sphi 0, %s36
      %s40 = sphi 0, %s39
      %s56 = sphi 0, %s40
      %s60 = sphi 0, %s60
      %s62 = sphi 0, %s60
      %s63 = sphi 0, %s62
      %s77 = sphi 0, %s63
      %s81 = sphi 0, %s81
      %s83 = sphi 0, %s81
      %s84 = sphi 0, %s83
      %s98 = sphi 0, %s84
      %s106 = sphi 0, %s108
      %s109 = sphi 0, %s106
      %s110 = sphi 0, %s109
      %s126 = sphi 0, %s110
    $region4: #{tpu_custom_call.1} parent=1 // loop_header_branch
      %15 = sbr.rel (%p13) target = $region8
    $region5: #{tpu_custom_call.1} parent=1 // loop_body
      %s17 = ssub.s32 %s12, 1
      %s18 = ssub.s32 %s12, 2
      %s25 = sadd.s32 1, %s20
      %p26 = scmp.ge.s32.totalorder %s25, 1
      %s27 = scalar_select %p26, 0, %s25
      %s28 = sadd.s32 1, %s19
      %s29 = scalar_select %p26, %s28, %s19
      %p30 = scmp.ge.s32.totalorder %s29, 2
      %s31 = scalar_select %p30, 0, %s29
      %s32 = ssub.s32 %s19, %s31
      %s33 = ssub.s32 %s20, %s27
      %s34 = sor.u32 %s32, %s33
      %p35 = scmp.eq.s32.totalorder %s34, 0
      %s37 = sadd.s32 %s36, 1
      %s38 = scalar_select %p35, %s36, %s37
      %p41 = pneg %p35
      %p42 = scmp.eq.s32.totalorder %s12, 1
      %p43 = por %p41, %p42
      %p44 = scmp.ne.s32.totalorder %s36, %s39
      %p45 = scmp.eq.s32.totalorder %s12, 0
      %p46 = por %p44, %p45
      %p47 = scmp.ne.s32.totalorder %s36, %s39
      %p48 = scmp.eq.s32.totalorder %s17, 1
      %p49 = por %p47, %p48
      %p50 = scmp.ne.s32.totalorder %s39, %s40
      %p51 = scmp.eq.s32.totalorder %s17, 0
      %p52 = por %p50, %p51
      %p53 = scmp.ne.s32.totalorder %s39, %s40
      %p54 = scmp.eq.s32.totalorder %s18, 1
      %p55 = por %p53, %p54
      %p57 = scmp.ne.s32.totalorder %s40, %s56
      %p58 = scmp.eq.s32.totalorder %s18, 0
      %p59 = por %p57, %p58
      %s61 = sadd.s32 %s60, 1
      %p64 = scmp.eq.s32.totalorder %s12, 1
      %p65 = scmp.ne.s32.totalorder %s60, %s62
      %p66 = scmp.eq.s32.totalorder %s12, 0
      %p67 = por %p65, %p66
      %p68 = scmp.ne.s32.totalorder %s60, %s62
      %p69 = scmp.eq.s32.totalorder %s17, 1
      %p70 = por %p68, %p69
      %p71 = scmp.ne.s32.totalorder %s62, %s63
      %p72 = scmp.eq.s32.totalorder %s17, 0
      %p73 = por %p71, %p72
      %p74 = scmp.ne.s32.totalorder %s62, %s63
      %p75 = scmp.eq.s32.totalorder %s18, 1
      %p76 = por %p74, %p75
      %p78 = scmp.ne.s32.totalorder %s63, %s77
      %p79 = scmp.eq.s32.totalorder %s18, 0
      %p80 = por %p78, %p79
      %s82 = sadd.s32 %s81, 1
      %p85 = scmp.eq.s32.totalorder %s12, 1
      %p86 = scmp.ne.s32.totalorder %s81, %s83
      %p87 = scmp.eq.s32.totalorder %s12, 0
      %p88 = por %p86, %p87
      %p89 = scmp.ne.s32.totalorder %s81, %s83
      %p90 = scmp.eq.s32.totalorder %s17, 1
      %p91 = por %p89, %p90
      %p92 = scmp.ne.s32.totalorder %s83, %s84
      %p93 = scmp.eq.s32.totalorder %s17, 0
      %p94 = por %p92, %p93
      %p95 = scmp.ne.s32.totalorder %s83, %s84
      %p96 = scmp.eq.s32.totalorder %s18, 1
      %p97 = por %p95, %p96
      %p99 = scmp.ne.s32.totalorder %s84, %s98
      %p100 = scmp.eq.s32.totalorder %s18, 0
      %p101 = por %p99, %p100
      %s102 = ssub.s32 %s19, %s31
      %s103 = ssub.s32 %s20, %s27
      %s104 = sor.u32 %s102, %s103
      %p105 = scmp.eq.s32.totalorder %s104, 0
      %s107 = sadd.s32 %s106, 1
      %s108 = scalar_select %p105, %s106, %s107
      %p111 = pneg %p105
      %p112 = scmp.eq.s32.totalorder %s12, 1
      %p113 = por %p111, %p112
      %p114 = scmp.ne.s32.totalorder %s106, %s109
      %p115 = scmp.eq.s32.totalorder %s12, 0
      %p116 = por %p114, %p115
      %p117 = scmp.ne.s32.totalorder %s106, %s109
      %p118 = scmp.eq.s32.totalorder %s17, 1
      %p119 = por %p117, %p118
      %p120 = scmp.ne.s32.totalorder %s109, %s110
      %p121 = scmp.eq.s32.totalorder %s17, 0
      %p122 = por %p120, %p121
      %p123 = scmp.ne.s32.totalorder %s109, %s110
      %p124 = scmp.eq.s32.totalorder %s18, 1
      %p125 = por %p123, %p124
      %p127 = scmp.ne.s32.totalorder %s110, %s126
      %p128 = scmp.eq.s32.totalorder %s18, 0
      %p129 = por %p127, %p128
      %p130 = scmp.le.s32.totalorder 1, %s12
      %p131 = scmp.lt.s32.totalorder %s12, 3
      %p132 = pnand %p130, %p131
      %p133 = pneg %p132
      // Predicated region
      $region9: #{tpu_custom_call.1} parent=5 // pred_check
        _
      $region10: #{tpu_custom_call.1} parent=5 // pred_check_branch
        %135 = sbr.rel (%p132) target = $region12
      $region11: #{tpu_custom_call.1} parent=5 // pred_region
        %s136 = ssub.s32 %s12, 1
        // Predicated region
        $region13: #{tpu_custom_call.1} parent=11 // pred_check
          %p137 = pneg %p73
        $region14: #{tpu_custom_call.1} parent=11 // pred_check_branch
          %139 = sbr.rel (%p137) target = $region16
        $region15: #{tpu_custom_call.1} parent=11 // pred_region
          _
        $region16: #{tpu_custom_call.1} parent=11 // pred_fallthru
          _
        // Predicated region
        $region17: #{tpu_custom_call.1} parent=11 // pred_check
          %p140 = pneg %p94
        $region18: #{tpu_custom_call.1} parent=11 // pred_check_branch
          %142 = sbr.rel (%p140) target = $region20
        $region19: #{tpu_custom_call.1} parent=11 // pred_region
          _
        $region20: #{tpu_custom_call.1} parent=11 // pred_fallthru
          _
      $region12: #{tpu_custom_call.1} parent=5 // pred_fallthru
        _
      %p143 = scmp.lt.s32.totalorder %s12, 2
      // Predicated region
      $region21: #{tpu_custom_call.1} parent=5 // pred_check
        %p144 = pneg %p143
      $region22: #{tpu_custom_call.1} parent=5 // pred_check_branch
        %146 = sbr.rel (%p144) target = $region24
      $region23: #{tpu_custom_call.1} parent=5 // pred_region
        // Predicated region
        $region25: #{tpu_custom_call.1} parent=23 // pred_check
          %p147 = pneg %p46
        $region26: #{tpu_custom_call.1} parent=23 // pred_check_branch
          %149 = sbr.rel (%p147) target = $region28
        $region27: #{tpu_custom_call.1} parent=23 // pred_region
          %s150 = smul.u32 2, %s20
          %p151 = scmp.lt.s32.totalorder %s19, 1
          %s152 = scalar_select %p151, %s19, 1
          %p153 = scmp.lt.s32.totalorder %s150, 1
          %s154 = scalar_select %p153, %s150, 1
          %s155 = smul.addr %s152, 2
          %s156 = sadd.s32 %s154, %s155
          %s157 = smul.addr %s156, 4
          %s158 = scalar_lea.vmem %s0, %s157
          %s159 = smul.u32 2, %s20
        $region28: #{tpu_custom_call.1} parent=23 // pred_fallthru
          _
      $region24: #{tpu_custom_call.1} parent=5 // pred_fallthru
        _
      %p160 = scmp.le.s32.totalorder 1, %s12
      %p161 = scmp.lt.s32.totalorder %s12, 3
      %p162 = pnand %p160, %p161
      %p163 = pneg %p162
      // Predicated region
      $region29: #{tpu_custom_call.1} parent=5 // pred_check
        _
      $region30: #{tpu_custom_call.1} parent=5 // pred_check_branch
        %165 = sbr.rel (%p162) target = $region32
      $region31: #{tpu_custom_call.1} parent=5 // pred_region
        %s166 = ssub.s32 %s12, 1
        %s167 = smul.u32 2, %s22
        %p168 = scmp.lt.s32.totalorder %s21, 1
        %s169 = scalar_select %p168, %s21, 1
        %p170 = scmp.lt.s32.totalorder %s167, 1
        %s171 = scalar_select %p170, %s167, 1
        %s172 = smul.addr %s169, 2
        %s173 = sadd.s32 %s171, %s172
        %s174 = smul.addr %s173, 4
        %s175 = scalar_lea.vmem %s0, %s174
        %p176 = pneg %p52
        %p177 = pneg %p49
        %p178 = pneg %p73
        %p179 = pneg %p70
        %p180 = pneg %p94
        %p181 = pneg %p91
        %p182 = pneg %p122
        %p183 = pneg %p119
        %s184 = sand.u32 %s109, 1
        %s185 = scalar_lea.sflag [#allocation3], %s184
        %s186 = sand.u32 %s109, 1
        %s187 = smul.addr %s186, 16
        %s188 = scalar_lea.vmem [#allocation2], %s187
        %s189 = smul.u32 2, %s22
        %p190 = scmp.lt.s32.totalorder %s21, 1
        %s191 = scalar_select %p190, %s21, 1
        %p192 = scmp.lt.s32.totalorder %s189, 1
        %s193 = scalar_select %p192, %s189, 1
        %s194 = smul.addr %s191, 2
        %s195 = sadd.s32 %s193, %s194
        %s196 = smul.addr %s195, 4
        %s197 = scalar_lea.vmem %s0, %s196
        %s198 = smul.u32 2, %s22
        %s199 = smul.u32 2, %s22
        %v200 = vld [vmem:[%s1] sm:$0xff]
        %v201 = vld [vmem:[%s2] sm:$0xff]
        %v202 = vld [vmem:[%s197] sm:$0xff]
        %204 = vset.pattern.permute.xlu0 0
        %205 = vperm.xlu0 %204, %v201
        %v206 = vpop.permute.xlu0 %205
        %209 = vst [vmem:[#allocation1] ss:$2 sm:$0xff] %v202
        %v210 = vld.sshfl [vmem:[#allocation1] sm:$0xff pattern:$0x75316420]
        %v211 = vld.sshfl [vmem:[#allocation1 + $0x8] sm:$0xff pattern:$0x75316420]
        %vm212 = vcmask 31744
        %v214 = vsel %vm212, %v200, 0
        %vm216 = vcmask 1043456
        %v217 = vsel %vm216, %v210, 0
        %v219 = vsel %vm216, %v211, 0
        %221 = vmatpush.msra.mxu0 0.0
        %222 = vmatpush.msra.mxu0 0.0
        %223 = vmatpush.msra.mxu0 0.0
        %224 = vmatpush.msra.mxu0 0.0
        %225 = vmatpush.msra.mxu0 0.0
        %226 = vmatpush.msra.mxu0 0.0
        %227 = vmatpush.msra.mxu0 0.0
        %228 = vmatpush.msra.mxu0 0.0
        %229 = vmatpush.msra.mxu0 0.0
        %230 = vmatpush.msra.mxu0 0.0
        %231 = vmatpush.msra.mxu0 0.0
        %232 = vmatpush.msra.mxu0 0.0
        %233 = vmatpush.msra.mxu0 0.0
        %234 = vmatpush.msra.mxu0 0.0
        %235 = vmatpush.msra.mxu0 0.0
        %236 = vmatpush.msra.mxu0 %v217
        %237 = vmatmul.f32.gmra.mxu0 %v214
        %v238 = vpop.f32.mrf.mxu0
        %v239 = vadd.f32 %v206, %v238
        %240 = vdwg.mxu0
        %241 = vmatpush.msra.mxu0 0.0
        %242 = vmatpush.msra.mxu0 0.0
        %243 = vmatpush.msra.mxu0 0.0
        %244 = vmatpush.msra.mxu0 0.0
        %245 = vmatpush.msra.mxu0 0.0
        %246 = vmatpush.msra.mxu0 0.0
        %247 = vmatpush.msra.mxu0 0.0
        %248 = vmatpush.msra.mxu0 0.0
        %249 = vmatpush.msra.mxu0 0.0
        %250 = vmatpush.msra.mxu0 0.0
        %251 = vmatpush.msra.mxu0 0.0
        %252 = vmatpush.msra.mxu0 0.0
        %253 = vmatpush.msra.mxu0 0.0
        %254 = vmatpush.msra.mxu0 0.0
        %255 = vmatpush.msra.mxu0 0.0
        %256 = vmatpush.msra.mxu0 %v219
        %257 = vmatmul.f32.gmra.mxu0 %v214
        %v258 = vpop.f32.mrf.mxu0
        %v259 = vadd.f32 %v206, %v258
        %260 = vdwg.mxu0
        %v261 = vmax.f32 %v239, 0.0
        %v262 = vmax.f32 %v259, 0.0
        %263 = vst [vmem:[%s188] sm:$0xff] %v261
        %264 = vst [vmem:[%s188 + $0x8] sm:$0xff] %v262
        %s265 = sand.u32 %s109, 1
        %s266 = scalar_lea.sflag [#allocation3], %s265
        %s267 = sand.u32 %s109, 1
        %s268 = smul.addr %s267, 16
        %s269 = scalar_lea.vmem [#allocation2], %s268
        // Predicated region
        $region33: #{tpu_custom_call.1} parent=31 // pred_check
          %p270 = pneg %p119
        $region34: #{tpu_custom_call.1} parent=31 // pred_check_branch
          %272 = sbr.rel (%p270) target = $region36
        $region35: #{tpu_custom_call.1} parent=31 // pred_region
          %s273 = smul.u32 2, %s22
          %275 = vsyncadd %s266, 0
          %s276 = smul.addr %s21, 2
          %s277 = sadd.s32 %s273, %s276
          %s278 = smul.addr %s277, 8
          %s279 = scalar_lea.hbm %s3, %s278
          %s281 = sshll.u32 %s269, 4
          %s282 = int_to_ptr.vmem [resolvable:$true] %s281
          %s283 = sshll.u32 %s279, 4
          %s284 = int_to_ptr.hbm [resolvable:$true] %s283
          %286 = dma.vmem_to_hbm [thread:$0]  %s282, 256, %s284, %s266
        $region36: #{tpu_custom_call.1} parent=31 // pred_fallthru
          _
      $region32: #{tpu_custom_call.1} parent=5 // pred_fallthru
        _
      %p287 = scmp.le.s32.totalorder 2, %s12
      // Predicated region
      $region37: #{tpu_custom_call.1} parent=5 // pred_check
        %p288 = pneg %p287
      $region38: #{tpu_custom_call.1} parent=5 // pred_check_branch
        %290 = sbr.rel (%p288) target = $region40
      $region39: #{tpu_custom_call.1} parent=5 // pred_region
        %s291 = ssub.s32 %s12, 2
        // Predicated region
        $region41: #{tpu_custom_call.1} parent=39 // pred_check
          %p292 = pneg %p125
        $region42: #{tpu_custom_call.1} parent=39 // pred_check_branch
          %294 = sbr.rel (%p292) target = $region44
        $region43: #{tpu_custom_call.1} parent=39 // pred_region
          %s295 = sand.u32 %s110, 1
          %s296 = scalar_lea.sflag [#allocation3], %s295
          %s297 = sand.u32 %s110, 1
          %s298 = smul.addr %s297, 16
          %s299 = scalar_lea.vmem [#allocation2], %s298
          %301 = dma.done %s296, 256
        $region44: #{tpu_custom_call.1} parent=39 // pred_fallthru
          _
      $region40: #{tpu_custom_call.1} parent=5 // pred_fallthru
        _
    $region6: #{tpu_custom_call.1} parent=1 // loop_footer
      %s16 = sadd.s32 1, %s12
    $region7: #{tpu_custom_call.1} parent=1 // loop_footer_branch
      %11 = sbr.rel target = $region3
    $region8: #{tpu_custom_call.1} parent=1 // loop_exit
      _
    %302 = vsyncpa [#allocation3], 1
    %s303 = scalar_lea.sflag [#allocation3], 1
    %304 = vsyncpa %s303, 1

</llo_original>
